<compile_context>
chip_gen: v6e
topology: v6e:2x2x1
jax: 0.10.0
libtpu: 0.0.40
codegen_flags: <defaults>
</compile_context>

<pallas_src>
import functools

import jax
import jax.numpy as jnp
import numpy as np
from jax import lax
from jax.experimental import pallas as pl
from jax.experimental.pallas import tpu as pltpu

_PAD_SCALE = 1.0e15   # multiplicative mask for padded organs (same constant as the reference)
_EXP_CLAMP = -80.0    # exp(x) == 0 in f32 for x <= -87.3; clamp keeps the TPU exp in range


def _organ_distance_kernel(anchors_ref, pred_ref, len_ref, out_ref, *, inv_batch):
    # anchors_ref: VMEM (TB, 3, O, P) f32  -- anchor points, coordinate-major
    # pred_ref:    VMEM (TB, 3, 1, 1) f32  -- predicted 3-D point per batch element
    # len_ref:     VMEM (TB, 1, 1)    i32  -- number of valid organs per batch element
    # out_ref:     VMEM (1, 1, 1)     f32  -- partial sum of per-batch losses, pre-scaled 1/B
    a = anchors_ref[...]
    p = pred_ref[...]
    lens = len_ref[...]

    tb_blk, _, num_o, num_p = a.shape

    # Euclidean distance prediction -> every anchor point (pure VPU work; K=3 stays off MXU).
    dx = a[:, 0] - p[:, 0]
    dy = a[:, 1] - p[:, 1]
    dz = a[:, 2] - p[:, 2]
    dist = jnp.sqrt(dx * dx + dy * dy + dz * dz)                      # (TB, O, P)

    # Organ-validity mask rebuilt in-kernel: 1.0 for organ < length, 1e15 for padded organs.
    organ_id = lax.broadcasted_iota(jnp.int32, (tb_blk, num_o, num_p), 1)
    m = jnp.where(organ_id < lens, jnp.float32(1.0), jnp.float32(_PAD_SCALE))
    dm = dist * m                                                      # (TB, O, P)

    # Softmin over sampled points (lane axis); normalisation folded into the weighted sum.
    # Clamping the (always <= 0) exponent argument at -80 only touches terms whose exact
    # weight is < 1e-35 (exactly what the reference rounds to 0) but keeps the TPU exp out
    # of the range where its argument reduction produces NaN.
    p_min = jnp.min(dm, axis=2, keepdims=True)                         # (TB, O, 1)
    pe = jnp.exp(jnp.maximum(p_min - dm, _EXP_CLAMP))                  # (TB, O, P)
    od = (jnp.sum(dm * pe, axis=2, keepdims=True)
          / jnp.sum(pe, axis=2, keepdims=True))                        # (TB, O, 1)

    # Softmin over organs (sublane axis); padded organs get weight ~1e-35 -> no contribution.
    o_min = jnp.min(od, axis=1, keepdims=True)                         # (TB, 1, 1)
    oe = jnp.exp(jnp.maximum(o_min - od, _EXP_CLAMP))                  # (TB, O, 1)
    per_batch = (jnp.sum(od * oe, axis=1, keepdims=True)
                 / jnp.sum(oe, axis=1, keepdims=True))                 # (TB, 1, 1)

    # Pre-scaled partial sum for this batch tile (summing the grid outputs == batch mean).
    out_ref[...] = jnp.reshape(jnp.sum(per_batch) * inv_batch, (1, 1, 1))


def _physical_vmem_bytes():
    """Physical VMEM per TensorCore; conservative fallback if the query is unavailable."""
    try:
        return int(pltpu.get_tpu_info().vmem_capacity_bytes)
    except Exception:
        return 64 * 1024 * 1024   # v7x per-TC size == smallest of the supported generations


def _pick_tb(B, O, P, vmem_bytes):
    """Batch-tile size: biggest tile whose working set fits comfortably in VMEM.

    Working set per grid step ~= 2x double-buffered anchor tile + ~half a dozen tile-sized
    f32 temporaries (dist / mask / weights) ~= 5-6 anchor tiles; budgeting one anchor tile
    at ~(0.6*VMEM)/8 leaves slack for the compiler.  Capping the tile at ceil(B/2) keeps
    >= 2 grid steps so the "parallel" batch axis can use both TensorCores on v7x.
    """
    budget = max(1 << 20, (vmem_bytes * 6 // 10) // 8)
    per_batch_bytes = 3 * O * P * 4
    tb = max(1, min(B, budget // max(per_batch_bytes, 1)))
    if B >= 2:
        tb = max(1, min(tb, -(-B // 2)))   # ceil(B/2)
    while B % tb:
        tb -= 1
    return tb


def to_coordinate_major(anchors):
    """[B, O, P, 3] -> [B, 3, O, P].

    Do this ONCE where the anchors are built/loaded (they are static per dataset): the loss
    kernel is HBM-bound and re-transposing on every call adds a full extra HBM pass over the
    anchor array.  Do NOT feed the natural [B, O, P, 3] layout to the kernel: a last dim of
    3 would occupy 3/128 lanes and inflate VMEM/DMA cost ~42x.
    """
    return jnp.transpose(anchors, (0, 3, 1, 2))


def organ_distance_loss(predictions, anchors_cm, lengths, *, tb=None):
    """Organ-distance loss.

    Args:
      predictions: [B, 3] float.
      anchors_cm:  [B, 3, O, P] float, coordinate-major anchors (see to_coordinate_major).
      lengths:     [B] int, number of valid organs per batch element (O == max(lengths)).
      tb:          optional batch-tile override.

    Returns: scalar f32 loss (same semantics as the PyTorch OrganDistanceLoss forward).
    """
    B, C, O, P = anchors_cm.shape
    if C != 3:
        raise ValueError("anchors_cm must be coordinate-major [B, 3, O, P]")

    predictions = predictions.astype(jnp.float32)
    anchors_cm = anchors_cm.astype(jnp.float32)
    lengths = lengths.astype(jnp.int32)

    vmem_bytes = _physical_vmem_bytes()
    if tb is None:
        tb = _pick_tb(B, O, P, vmem_bytes)
    tb = max(1, min(int(tb), B))
    while B % tb:
        tb -= 1
    grid = B // tb

    # TODO(synk): if a single batch element's (3, O, P) tile exceeds the VMEM budget
    # (3*O*P*4 >~ vmem/8), add an organ-tiling grid axis with an online softmin accumulator
    # (pl.when init/finalize, axis marked "arbitrary") instead of relying on a bigger limit.
    anchor_tile_bytes = tb * 3 * O * P * 4
    vmem_limit = min(int(vmem_bytes * 0.9),
                     max(32 * 1024 * 1024, anchor_tile_bytes * 8 + (1 << 20)))

    pred_cm = predictions.reshape(B, 3, 1, 1)
    lens_cm = lengths.reshape(B, 1, 1)

    kernel = functools.partial(_organ_distance_kernel, inv_batch=float(1.0 / B))

    partial_sums = pl.pallas_call(
        kernel,
        out_shape=jax.ShapeDtypeStruct((grid, 1, 1), jnp.float32),
        grid=(grid,),
        in_specs=[
            pl.BlockSpec((tb, 3, O, P), lambda i: (i, 0, 0, 0)),
            pl.BlockSpec((tb, 3, 1, 1), lambda i: (i, 0, 0, 0)),
            pl.BlockSpec((tb, 1, 1), lambda i: (i, 0, 0)),
        ],
        out_specs=pl.BlockSpec((1, 1, 1), lambda i: (i, 0, 0)),
        compiler_params=pltpu.CompilerParams(
            dimension_semantics=("parallel",),
            vmem_limit_bytes=int(vmem_limit),
        ),
    )(anchors_cm, pred_cm, lens_cm)

    # Partials are pre-scaled by 1/B, so summing the `grid` scalars gives the batch mean.
    return jnp.sum(partial_sums)


def organ_distance_loss_from_natural(predictions, anchors, lengths, *, tb=None):
    """Convenience wrapper taking the module's natural [B, O, P, 3] anchors.  Prefer storing
    anchors coordinate-major and calling organ_distance_loss directly (saves one HBM pass)."""
    return organ_distance_loss(predictions, to_coordinate_major(anchors), lengths, tb=tb)


def _reference_loss_np(predictions, anchors, lengths):
    """Pure-NumPy float64 reference mirroring the PyTorch module exactly."""
    predictions = np.asarray(predictions, dtype=np.float64)
    anchors = np.asarray(anchors, dtype=np.float64)
    lengths = np.asarray(lengths)
    B, O, P, _ = anchors.shape
    mask = (np.arange(O)[None, :] < lengths[:, None]).astype(np.float64)
    mask[mask == 0] = _PAD_SCALE
    mask = mask[:, :, None]
    pred = predictions[:, None, None, :]
    dist = np.sqrt(((pred - anchors) ** 2).sum(axis=3))
    dm = dist * mask
    pw = np.exp(-dm + dm.min(axis=2, keepdims=True))      # softmin over points
    pw /= pw.sum(axis=2, keepdims=True)
    od = (dm * pw).sum(axis=2)
    ow = np.exp(-od + od.min(axis=1, keepdims=True))      # softmin over organs
    ow /= ow.sum(axis=1, keepdims=True)
    return float((od * ow).sum(axis=1).mean())


if __name__ == "__main__":
    key = jax.random.PRNGKey(0)
    B, O, P = 4, 8, 128   # batch, max organs (== max(lengths)), sampled points per organ

    k1, k2 = jax.random.split(key)
    predictions = jax.random.normal(k1, (B, 3), dtype=jnp.float32)
    anchors = jax.random.normal(k2, (B, O, P, 3), dtype=jnp.float32)
    lengths = jnp.array([8, 5, 3, 8], dtype=jnp.int32)    # max(lengths) == O

    # One-time layout conversion; production code should keep anchors stored in this
    # coordinate-major layout so the loss call itself never re-reads the anchor array.
    anchors_cm = to_coordinate_major(anchors)

    loss = organ_distance_loss(predictions, anchors_cm, lengths)
    loss = jax.block_until_ready(loss)

    ref = _reference_loss_np(predictions, anchors, lengths)
    assert bool(jnp.isfinite(loss)), loss
    assert abs(float(loss) - ref) <= 1e-4 * max(1.0, abs(ref)), (float(loss), ref)

    print("KERNEL_OK")
</pallas_src>

<mosaic_0001>
module attributes {stable_mosaic.version = 11 : i64} {
  func.func @_organ_distance_kernel(%arg0: i32, %arg1: memref<2x3x8x128xf32, #tpu.memory_space<vmem>>, %arg2: memref<2x3x1x1xf32, #tpu.memory_space<vmem>>, %arg3: memref<2x1x1xi32, #tpu.memory_space<vmem>>, %arg4: memref<1x1x1xf32, #tpu.memory_space<vmem>>) attributes {dimension_semantics = [#tpu.dimension_semantics<parallel>], iteration_bounds = array<i64: 2>, scalar_prefetch = 0 : i64, scratch_operands = 0 : i64, tpu.core_type = #tpu.core_type<tc>, window_params = [{transform_indices = @transform_0, window_bounds = array<i64: 2, 3, 8, 128>}, {transform_indices = @transform_1, window_bounds = array<i64: 2, 3, 1, 1>}, {transform_indices = @transform_2, window_bounds = array<i64: 2, 1, 1>}, {transform_indices = @transform_3, window_bounds = array<i64: 1, 1, 1>}]} {
    %c0 = arith.constant 0 : index
    %c0_0 = arith.constant 0 : index
    %c0_1 = arith.constant 0 : index
    %c0_2 = arith.constant 0 : index
    %0 = vector.load %arg1[%c0, %c0_0, %c0_1, %c0_2] : memref<2x3x8x128xf32, #tpu.memory_space<vmem>>, vector<2x3x8x128xf32>
    %c0_3 = arith.constant 0 : index
    %c0_4 = arith.constant 0 : index
    %c0_5 = arith.constant 0 : index
    %c0_6 = arith.constant 0 : index
    %1 = vector.load %arg2[%c0_3, %c0_4, %c0_5, %c0_6] : memref<2x3x1x1xf32, #tpu.memory_space<vmem>>, vector<2x3x1x1xf32>
    %c0_7 = arith.constant 0 : index
    %c0_8 = arith.constant 0 : index
    %c0_9 = arith.constant 0 : index
    %2 = vector.load %arg3[%c0_7, %c0_8, %c0_9] : memref<2x1x1xi32, #tpu.memory_space<vmem>>, vector<2x1x1xi32>
    %3 = vector.extract_strided_slice %0 {offsets = [0, 0, 0, 0], sizes = [2, 1, 8, 128], strides = [1, 1, 1, 1]} : vector<2x3x8x128xf32> to vector<2x1x8x128xf32>
    %4 = vector.shape_cast %3 : vector<2x1x8x128xf32> to vector<2x8x128xf32>
    %5 = vector.extract_strided_slice %1 {offsets = [0, 0, 0, 0], sizes = [2, 1, 1, 1], strides = [1, 1, 1, 1]} : vector<2x3x1x1xf32> to vector<2x1x1x1xf32>
    %6 = vector.shape_cast %5 : vector<2x1x1x1xf32> to vector<2x1x1xf32>
    %7 = vector.broadcast %6 : vector<2x1x1xf32> to vector<2x8x128xf32>
    %8 = arith.subf %4, %7 : vector<2x8x128xf32>
    %9 = vector.extract_strided_slice %0 {offsets = [0, 1, 0, 0], sizes = [2, 1, 8, 128], strides = [1, 1, 1, 1]} : vector<2x3x8x128xf32> to vector<2x1x8x128xf32>
    %10 = vector.shape_cast %9 : vector<2x1x8x128xf32> to vector<2x8x128xf32>
    %11 = vector.extract_strided_slice %1 {offsets = [0, 1, 0, 0], sizes = [2, 1, 1, 1], strides = [1, 1, 1, 1]} : vector<2x3x1x1xf32> to vector<2x1x1x1xf32>
    %12 = vector.shape_cast %11 : vector<2x1x1x1xf32> to vector<2x1x1xf32>
    %13 = vector.broadcast %12 : vector<2x1x1xf32> to vector<2x8x128xf32>
    %14 = arith.subf %10, %13 : vector<2x8x128xf32>
    %15 = vector.extract_strided_slice %0 {offsets = [0, 2, 0, 0], sizes = [2, 1, 8, 128], strides = [1, 1, 1, 1]} : vector<2x3x8x128xf32> to vector<2x1x8x128xf32>
    %16 = vector.shape_cast %15 : vector<2x1x8x128xf32> to vector<2x8x128xf32>
    %17 = vector.extract_strided_slice %1 {offsets = [0, 2, 0, 0], sizes = [2, 1, 1, 1], strides = [1, 1, 1, 1]} : vector<2x3x1x1xf32> to vector<2x1x1x1xf32>
    %18 = vector.shape_cast %17 : vector<2x1x1x1xf32> to vector<2x1x1xf32>
    %19 = vector.broadcast %18 : vector<2x1x1xf32> to vector<2x8x128xf32>
    %20 = arith.subf %16, %19 : vector<2x8x128xf32>
    %21 = arith.mulf %8, %8 : vector<2x8x128xf32>
    %22 = arith.mulf %14, %14 : vector<2x8x128xf32>
    %23 = arith.addf %21, %22 : vector<2x8x128xf32>
    %24 = arith.mulf %20, %20 : vector<2x8x128xf32>
    %25 = arith.addf %23, %24 : vector<2x8x128xf32>
    %26 = math.sqrt %25 : vector<2x8x128xf32>
    %27 = tpu.iota {dimensions = array<i32: 1>} : vector<2x8x128xi32>
    %28 = vector.broadcast %2 : vector<2x1x1xi32> to vector<2x8x128xi32>
    %29 = arith.cmpi slt, %27, %28 : vector<2x8x128xi32>
    %cst = arith.constant 1.000000e+00 : f32
    %cst_10 = arith.constant 9.99999986E+14 : f32
    %30 = vector.broadcast %cst : f32 to vector<2x8x128xf32>
    %31 = vector.broadcast %cst_10 : f32 to vector<2x8x128xf32>
    %32 = arith.select %29, %30, %31 : vector<2x8x128xi1>, vector<2x8x128xf32>
    %33 = arith.mulf %26, %32 : vector<2x8x128xf32>
    %cst_11 = arith.constant dense<0x7F800000> : vector<2x8xf32>
    %34 = vector.multi_reduction <minimumf>, %33, %cst_11 [2] : vector<2x8x128xf32> to vector<2x8xf32>
    %35 = vector.shape_cast %34 : vector<2x8xf32> to vector<2x8x1xf32>
    %36 = vector.broadcast %35 : vector<2x8x1xf32> to vector<2x8x128xf32>
    %37 = arith.subf %36, %33 : vector<2x8x128xf32>
    %cst_12 = arith.constant -8.000000e+01 : f32
    %38 = vector.broadcast %cst_12 : f32 to vector<2x8x128xf32>
    %39 = arith.maximumf %37, %38 : vector<2x8x128xf32>
    %40 = math.exp %39 : vector<2x8x128xf32>
    %41 = arith.mulf %33, %40 : vector<2x8x128xf32>
    %cst_13 = arith.constant dense<0.000000e+00> : vector<2x8xf32>
    %42 = vector.multi_reduction <add>, %41, %cst_13 [2] : vector<2x8x128xf32> to vector<2x8xf32>
    %43 = vector.shape_cast %42 : vector<2x8xf32> to vector<2x8x1xf32>
    %cst_14 = arith.constant dense<0.000000e+00> : vector<2x8xf32>
    %44 = vector.multi_reduction <add>, %40, %cst_14 [2] : vector<2x8x128xf32> to vector<2x8xf32>
    %45 = vector.shape_cast %44 : vector<2x8xf32> to vector<2x8x1xf32>
    %46 = arith.divf %43, %45 : vector<2x8x1xf32>
    %cst_15 = arith.constant dense<0x7F800000> : vector<2x1xf32>
    %47 = vector.multi_reduction <minimumf>, %46, %cst_15 [1] : vector<2x8x1xf32> to vector<2x1xf32>
    %48 = vector.shape_cast %47 : vector<2x1xf32> to vector<2x1x1xf32>
    %49 = vector.broadcast %48 : vector<2x1x1xf32> to vector<2x8x1xf32>
    %50 = arith.subf %49, %46 : vector<2x8x1xf32>
    %cst_16 = arith.constant -8.000000e+01 : f32
    %51 = vector.broadcast %cst_16 : f32 to vector<2x8x1xf32>
    %52 = arith.maximumf %50, %51 : vector<2x8x1xf32>
    %53 = math.exp %52 : vector<2x8x1xf32>
    %54 = arith.mulf %46, %53 : vector<2x8x1xf32>
    %cst_17 = arith.constant dense<0.000000e+00> : vector<2x1xf32>
    %55 = vector.multi_reduction <add>, %54, %cst_17 [1] : vector<2x8x1xf32> to vector<2x1xf32>
    %56 = vector.shape_cast %55 : vector<2x1xf32> to vector<2x1x1xf32>
    %cst_18 = arith.constant dense<0.000000e+00> : vector<2x1xf32>
    %57 = vector.multi_reduction <add>, %53, %cst_18 [1] : vector<2x8x1xf32> to vector<2x1xf32>
    %58 = vector.shape_cast %57 : vector<2x1xf32> to vector<2x1x1xf32>
    %59 = arith.divf %56, %58 : vector<2x1x1xf32>
    %60 = vector.shape_cast %59 : vector<2x1x1xf32> to vector<1x2x1x1xf32>
    %cst_19 = arith.constant dense<0.000000e+00> : vector<1xf32>
    %61 = vector.multi_reduction <add>, %60, %cst_19 [1, 2, 3] : vector<1x2x1x1xf32> to vector<1xf32>
    %62 = vector.shape_cast %61 : vector<1xf32> to vector<1x1x1x1xf32>
    %63 = vector.extract %62[0, 0, 0, 0] : f32 from vector<1x1x1x1xf32>
    %cst_20 = arith.constant 2.500000e-01 : f32
    %64 = arith.mulf %63, %cst_20 : f32
    %65 = vector.broadcast %64 : f32 to vector<1x1x1xf32>
    %c0_21 = arith.constant 0 : index
    %c0_22 = arith.constant 0 : index
    %c0_23 = arith.constant 0 : index
    %66 = vector.load %arg4[%c0_21, %c0_22, %c0_23] : memref<1x1x1xf32, #tpu.memory_space<vmem>>, vector<1x1x1xf32>
    tpu.vector_store %arg4[%c0_21, %c0_22, %c0_23], %65 {strides = array<i32>} : memref<1x1x1xf32, #tpu.memory_space<vmem>>, vector<1x1x1xf32>,
    return
  }
  func.func @transform_0(%arg0: i32) -> (i32, i32, i32, i32) {
    %c0_i32 = arith.constant 0 : i32
    %c0_i32_0 = arith.constant 0 : i32
    %c0_i32_1 = arith.constant 0 : i32
    %c0_i32_2 = arith.constant 0 : i32
    return %arg0, %c0_i32, %c0_i32_0, %c0_i32_1 : i32, i32, i32, i32
  }
  func.func @transform_1(%arg0: i32) -> (i32, i32, i32, i32) {
    %c0_i32 = arith.constant 0 : i32
    %c0_i32_0 = arith.constant 0 : i32
    %c0_i32_1 = arith.constant 0 : i32
    %c0_i32_2 = arith.constant 0 : i32
    return %arg0, %c0_i32, %c0_i32_0, %c0_i32_1 : i32, i32, i32, i32
  }
  func.func @transform_2(%arg0: i32) -> (i32, i32, i32) {
    %c0_i32 = arith.constant 0 : i32
    %c0_i32_0 = arith.constant 0 : i32
    %c0_i32_1 = arith.constant 0 : i32
    return %arg0, %c0_i32, %c0_i32_0 : i32, i32, i32
  }
  func.func @transform_3(%arg0: i32) -> (i32, i32, i32) {
    %c0_i32 = arith.constant 0 : i32
    %c0_i32_0 = arith.constant 0 : i32
    %c0_i32_1 = arith.constant 0 : i32
    return %arg0, %c0_i32, %c0_i32_0 : i32, i32, i32
  }
}

</mosaic_0001>

<llo_original>
// kernel: tpu_custom_call.1
$region0: #{tpu_custom_call.1}
  #allocation0 [shape = 'u32[]', space=smem, size = 0x4, offset = 0x4, fixed_abs, tag = 'smem constant byte address 0x4 - core index']
  #allocation1 [shape = 'u32[144,128]{1,0:T(1,128)}', space=vmem, size = 0x12000, scoped, tag = 'internal scratch']
  %s0 = inlined_call_operand.hbm [shape: f32[4,3,8,128], index: 0, kind: input, shape index: {}]
  %s1 = inlined_call_operand.vmem [shape: f32[4,3,1,1], index: 1, kind: input, shape index: {}]
  %s2 = inlined_call_operand.vmem [shape: s32[4,1,1], index: 2, kind: input, shape index: {}]
  %s3 = inlined_call_operand.vmem [shape: f32[2,1,1], index: 3, kind: output, shape index: {}]
  %s4 = sld [smem:[#allocation0]]
  $region49: #{tpu_custom_call.1} parent=0
    _
  %s6 = ssub.s32 1, %s4
  %s7 = scalar_select 0, %s6, %s4
  $region1: #{tpu_custom_call.1} parent=0
    #allocation2 [shape = 'u8[49152]{0}', space=vmem, size = 0xc000, scoped, tag = 'input window, operand 0']
    #allocation3 [shape = 's32[2]{0}', space=sflag, size = 0x8, scoped, tag = 'scoped memory for tpu_custom_call.1']
    %8 = vsyncpa [#allocation3], 0
    %s9 = scalar_lea.sflag [#allocation3], 1
    %10 = vsyncpa %s9, 0
    loop: start=0, step=1, limit=4
    $region2: #{tpu_custom_call.1} parent=1 // loop_pre_header
      _
    $region3: #{tpu_custom_call.1} parent=1 // loop_header
      %s12 = sphi 0, %s16
      %p13 = scmp.ge.s32.totalorder %s12, 4
      %s22 = sphi 0, %s24
      %s25 = sphi 0, %s22
      %s26 = sphi 0, %s25
      %s42 = sphi 0, %s26
      %s48 = sphi 0, %s50
      %s51 = sphi 0, %s48
      %s52 = sphi 0, %s51
      %s68 = sphi 0, %s52
      %s74 = sphi 0, %s76
      %s77 = sphi 0, %s74
      %s78 = sphi 0, %s77
      %s94 = sphi 0, %s78
      %s100 = sphi 0, %s102
      %s103 = sphi 0, %s100
      %s104 = sphi 0, %s103
      %s120 = sphi 0, %s104
    $region4: #{tpu_custom_call.1} parent=1 // loop_header_branch
      %15 = sbr.rel (%p13) target = $region8
    $region5: #{tpu_custom_call.1} parent=1 // loop_body
      %s17 = ssub.s32 %s12, 1
      %s18 = ssub.s32 %s12, 2
      %s19 = sadd.s32 %s12, 1
      %s20 = ssub.s32 %s12, %s19
      %p21 = scmp.eq.s32.totalorder %s20, 0
      %s23 = sadd.s32 %s22, 1
      %s24 = scalar_select %p21, %s22, %s23
      %p27 = pneg %p21
      %p28 = scmp.eq.s32.totalorder %s12, 1
      %p29 = por %p27, %p28
      %p30 = scmp.ne.s32.totalorder %s22, %s25
      %p31 = scmp.eq.s32.totalorder %s12, 0
      %p32 = por %p30, %p31
      %p33 = scmp.ne.s32.totalorder %s22, %s25
      %p34 = scmp.eq.s32.totalorder %s17, 1
      %p35 = por %p33, %p34
      %p36 = scmp.ne.s32.totalorder %s25, %s26
      %p37 = scmp.eq.s32.totalorder %s17, 0
      %p38 = por %p36, %p37
      %p39 = scmp.ne.s32.totalorder %s25, %s26
      %p40 = scmp.eq.s32.totalorder %s18, 1
      %p41 = por %p39, %p40
      %p43 = scmp.ne.s32.totalorder %s26, %s42
      %p44 = scmp.eq.s32.totalorder %s18, 0
      %p45 = por %p43, %p44
      %s46 = ssub.s32 %s12, %s19
      %p47 = scmp.eq.s32.totalorder %s46, 0
      %s49 = sadd.s32 %s48, 1
      %s50 = scalar_select %p47, %s48, %s49
      %p53 = pneg %p47
      %p54 = scmp.eq.s32.totalorder %s12, 1
      %p55 = por %p53, %p54
      %p56 = scmp.ne.s32.totalorder %s48, %s51
      %p57 = scmp.eq.s32.totalorder %s12, 0
      %p58 = por %p56, %p57
      %p59 = scmp.ne.s32.totalorder %s48, %s51
      %p60 = scmp.eq.s32.totalorder %s17, 1
      %p61 = por %p59, %p60
      %p62 = scmp.ne.s32.totalorder %s51, %s52
      %p63 = scmp.eq.s32.totalorder %s17, 0
      %p64 = por %p62, %p63
      %p65 = scmp.ne.s32.totalorder %s51, %s52
      %p66 = scmp.eq.s32.totalorder %s18, 1
      %p67 = por %p65, %p66
      %p69 = scmp.ne.s32.totalorder %s52, %s68
      %p70 = scmp.eq.s32.totalorder %s18, 0
      %p71 = por %p69, %p70
      %s72 = ssub.s32 %s12, %s19
      %p73 = scmp.eq.s32.totalorder %s72, 0
      %s75 = sadd.s32 %s74, 1
      %s76 = scalar_select %p73, %s74, %s75
      %p79 = pneg %p73
      %p80 = scmp.eq.s32.totalorder %s12, 1
      %p81 = por %p79, %p80
      %p82 = scmp.ne.s32.totalorder %s74, %s77
      %p83 = scmp.eq.s32.totalorder %s12, 0
      %p84 = por %p82, %p83
      %p85 = scmp.ne.s32.totalorder %s74, %s77
      %p86 = scmp.eq.s32.totalorder %s17, 1
      %p87 = por %p85, %p86
      %p88 = scmp.ne.s32.totalorder %s77, %s78
      %p89 = scmp.eq.s32.totalorder %s17, 0
      %p90 = por %p88, %p89
      %p91 = scmp.ne.s32.totalorder %s77, %s78
      %p92 = scmp.eq.s32.totalorder %s18, 1
      %p93 = por %p91, %p92
      %p95 = scmp.ne.s32.totalorder %s78, %s94
      %p96 = scmp.eq.s32.totalorder %s18, 0
      %p97 = por %p95, %p96
      %s98 = ssub.s32 %s12, %s19
      %p99 = scmp.eq.s32.totalorder %s98, 0
      %s101 = sadd.s32 %s100, 1
      %s102 = scalar_select %p99, %s100, %s101
      %p105 = pneg %p99
      %p106 = scmp.eq.s32.totalorder %s12, 1
      %p107 = por %p105, %p106
      %p108 = scmp.ne.s32.totalorder %s100, %s103
      %p109 = scmp.eq.s32.totalorder %s12, 0
      %p110 = por %p108, %p109
      %p111 = scmp.ne.s32.totalorder %s100, %s103
      %p112 = scmp.eq.s32.totalorder %s17, 1
      %p113 = por %p111, %p112
      %p114 = scmp.ne.s32.totalorder %s103, %s104
      %p115 = scmp.eq.s32.totalorder %s17, 0
      %p116 = por %p114, %p115
      %p117 = scmp.ne.s32.totalorder %s103, %s104
      %p118 = scmp.eq.s32.totalorder %s18, 1
      %p119 = por %p117, %p118
      %p121 = scmp.ne.s32.totalorder %s104, %s120
      %p122 = scmp.eq.s32.totalorder %s18, 0
      %p123 = por %p121, %p122
      %p124 = scmp.le.s32.totalorder 1, %s12
      %p125 = scmp.lt.s32.totalorder %s12, 3
      %p126 = pnand %p124, %p125
      %p127 = pneg %p126
      // Predicated region
      $region9: #{tpu_custom_call.1} parent=5 // pred_check
        _
      $region10: #{tpu_custom_call.1} parent=5 // pred_check_branch
        %129 = sbr.rel (%p126) target = $region12
      $region11: #{tpu_custom_call.1} parent=5 // pred_region
        %s130 = ssub.s32 %s12, 1
      $region12: #{tpu_custom_call.1} parent=5 // pred_fallthru
        _
      %p131 = scmp.lt.s32.totalorder %s12, 2
      // Predicated region
      $region13: #{tpu_custom_call.1} parent=5 // pred_check
        %p132 = pneg %p131
      $region14: #{tpu_custom_call.1} parent=5 // pred_check_branch
        %134 = sbr.rel (%p132) target = $region16
      $region15: #{tpu_custom_call.1} parent=5 // pred_region
        // Predicated region
        $region17: #{tpu_custom_call.1} parent=15 // pred_check
          %p135 = pneg %p32
        $region18: #{tpu_custom_call.1} parent=15 // pred_check_branch
          %137 = sbr.rel (%p135) target = $region20
        $region19: #{tpu_custom_call.1} parent=15 // pred_region
          %s138 = sand.u32 %s22, 1
          %s139 = scalar_lea.sflag [#allocation3], %s138
          %s140 = sand.u32 %s22, 1
          %s141 = smul.addr %s140, 48
          %s142 = scalar_lea.vmem [#allocation2], %s141
          %s143 = smul.u32 2, %s12
          %s145 = ssub.s32 768, 768
          %146 = vsyncadd %s139, %s145
          %s147 = smul.addr %s143, 3
          %s148 = smul.addr %s147, 128
          %s149 = scalar_lea.hbm %s0, %s148
          %s150 = sshll.u32 %s142, 4
          %s151 = int_to_ptr.vmem [resolvable:$true] %s150
          %156 = dma.hbm_to_vmem [thread:$0]  %s149, 768, %s151, %s139, 128, 128, 8
        $region20: #{tpu_custom_call.1} parent=15 // pred_fallthru
          _
        // Predicated region
        $region21: #{tpu_custom_call.1} parent=15 // pred_check
          %p157 = pneg %p58
        $region22: #{tpu_custom_call.1} parent=15 // pred_check_branch
          %159 = sbr.rel (%p157) target = $region24
        $region23: #{tpu_custom_call.1} parent=15 // pred_region
          %s160 = smul.u32 2, %s12
          %p161 = scmp.lt.s32.totalorder %s160, 3
          %s162 = scalar_select %p161, %s160, 3
          %s163 = smul.addr %s162, 3
          %s164 = scalar_lea.vmem %s1, %s163
          %s165 = smul.u32 2, %s12
        $region24: #{tpu_custom_call.1} parent=15 // pred_fallthru
          _
        // Predicated region
        $region25: #{tpu_custom_call.1} parent=15 // pred_check
          %p166 = pneg %p84
        $region26: #{tpu_custom_call.1} parent=15 // pred_check_branch
          %168 = sbr.rel (%p166) target = $region28
        $region27: #{tpu_custom_call.1} parent=15 // pred_region
          %s169 = smul.u32 2, %s12
          %p170 = scmp.lt.s32.totalorder %s169, 3
          %s171 = scalar_select %p170, %s169, 3
          %s172 = scalar_lea.vmem %s2, %s171
          %s173 = smul.u32 2, %s12
        $region28: #{tpu_custom_call.1} parent=15 // pred_fallthru
          _
      $region16: #{tpu_custom_call.1} parent=5 // pred_fallthru
        _
      %p174 = scmp.le.s32.totalorder 1, %s12
      %p175 = scmp.lt.s32.totalorder %s12, 3
      %p176 = pnand %p174, %p175
      %p177 = pneg %p176
      // Predicated region
      $region29: #{tpu_custom_call.1} parent=5 // pred_check
        _
      $region30: #{tpu_custom_call.1} parent=5 // pred_check_branch
        %179 = sbr.rel (%p176) target = $region32
      $region31: #{tpu_custom_call.1} parent=5 // pred_region
        %s180 = ssub.s32 %s12, 1
        %s181 = sand.u32 %s25, 1
        %s182 = scalar_lea.sflag [#allocation3], %s181
        %s183 = sand.u32 %s25, 1
        %s184 = smul.addr %s183, 48
        %s185 = scalar_lea.vmem [#allocation2], %s184
        // Predicated region
        $region33: #{tpu_custom_call.1} parent=31 // pred_check
          %p186 = pneg %p38
        $region34: #{tpu_custom_call.1} parent=31 // pred_check_branch
          %188 = sbr.rel (%p186) target = $region36
        $region35: #{tpu_custom_call.1} parent=31 // pred_region
          %189 = dma.done %s182, 768
        $region36: #{tpu_custom_call.1} parent=31 // pred_fallthru
          _
        %s190 = sand.u32 %s25, 1
        %s191 = scalar_lea.sflag [#allocation3], %s190
        %s192 = sand.u32 %s25, 1
        %s193 = smul.addr %s192, 48
        %s194 = scalar_lea.vmem [#allocation2], %s193
        %p195 = pneg %p38
        %p196 = pneg %p35
        %s197 = smul.u32 2, %s17
        %p198 = scmp.lt.s32.totalorder %s197, 3
        %s199 = scalar_select %p198, %s197, 3
        %s200 = smul.addr %s199, 3
        %s201 = scalar_lea.vmem %s1, %s200
        %p202 = pneg %p64
        %p203 = pneg %p61
        %s204 = smul.u32 2, %s17
        %p205 = scmp.lt.s32.totalorder %s204, 3
        %s206 = scalar_select %p205, %s204, 3
        %s207 = scalar_lea.vmem %s2, %s206
        %p208 = pneg %p90
        %p209 = pneg %p87
        %p210 = pneg %p116
        %p211 = pneg %p113
        %p212 = scmp.lt.s32.totalorder %s17, 1
        %s213 = scalar_select %p212, %s17, 1
        %s214 = scalar_lea.vmem %s3, %s213
        %s215 = smul.u32 2, %s17
        %s216 = smul.u32 2, %s17
        %p217 = scmp.lt.s32.totalorder %s216, 3
        %s218 = scalar_select %p217, %s216, 3
        %s219 = smul.addr %s218, 3
        %s220 = scalar_lea.vmem %s1, %s219
        %s221 = smul.u32 2, %s17
        %s222 = smul.u32 2, %s17
        %p223 = scmp.lt.s32.totalorder %s222, 3
        %s224 = scalar_select %p223, %s222, 3
        %s225 = scalar_lea.vmem %s2, %s224
        %s226 = smul.u32 2, %s17
        %p227 = scmp.lt.s32.totalorder %s17, 1
        %s228 = scalar_select %p227, %s17, 1
        %s229 = scalar_lea.vmem %s3, %s228
        %v230 = vld [vmem:[%s185] sm:$0xff]
        %v231 = vld [vmem:[%s185 + $0x8] sm:$0xff]
        %v232 = vld [vmem:[%s185 + $0x10] sm:$0xff]
        %v233 = vld [vmem:[%s185 + $0x18] sm:$0xff]
        %v234 = vld [vmem:[%s185 + $0x20] sm:$0xff]
        %v235 = vld [vmem:[%s185 + $0x28] sm:$0xff]
        %v236 = vld [vmem:[%s220] sm:$0x1]
        %v237 = vld [vmem:[%s220 + $0x1] sm:$0x1]
        %v238 = vld [vmem:[%s220 + $0x2] sm:$0x1]
        %v239 = vld [vmem:[%s220 + $0x3] sm:$0x1]
        %v240 = vld [vmem:[%s220 + $0x4] sm:$0x1]
        %v241 = vld [vmem:[%s220 + $0x5] sm:$0x1]
        %v242 = vld [vmem:[%s225] sm:$0x1]
        %v243 = vld [vmem:[%s225 + $0x1] sm:$0x1]
        %v246 = vlaneseq
        %v247 = vshrl.u32 %v246, 7
        %v248 = vsub.s32 0, %v247
        %v249 = vrot.slane %v236, %v248
        %v250 = vlaneseq
        %v251 = vshrl.u32 %v250, 7
        %v252 = vsub.s32 0, %v251
        %v253 = vrot.slane %v239, %v252
        %254 = vset.pattern.permute.xlu0 0
        %255 = vperm.xlu0 %254, %v249
        %v256 = vpop.permute.xlu0 %255
        %258 = vset.pattern.permute.xlu0 0
        %259 = vperm.xlu0 %258, %v253
        %v260 = vpop.permute.xlu0 %259
        %v262 = vsub.f32 %v230, %v256
        %v263 = vsub.f32 %v233, %v260
        %v266 = vlaneseq
        %v267 = vshrl.u32 %v266, 7
        %v268 = vsub.s32 0, %v267
        %v269 = vrot.slane %v237, %v268
        %v270 = vlaneseq
        %v271 = vshrl.u32 %v270, 7
        %v272 = vsub.s32 0, %v271
        %v273 = vrot.slane %v240, %v272
        %274 = vset.pattern.permute.xlu0 0
        %275 = vperm.xlu0 %274, %v269
        %v276 = vpop.permute.xlu0 %275
        %278 = vset.pattern.permute.xlu0 0
        %279 = vperm.xlu0 %278, %v273
        %v280 = vpop.permute.xlu0 %279
        %v282 = vsub.f32 %v231, %v276
        %v283 = vsub.f32 %v234, %v280
        %v286 = vlaneseq
        %v287 = vshrl.u32 %v286, 7
        %v288 = vsub.s32 0, %v287
        %v289 = vrot.slane %v238, %v288
        %v290 = vlaneseq
        %v291 = vshrl.u32 %v290, 7
        %v292 = vsub.s32 0, %v291
        %v293 = vrot.slane %v241, %v292
        %294 = vset.pattern.permute.xlu0 0
        %295 = vperm.xlu0 %294, %v289
        %v296 = vpop.permute.xlu0 %295
        %298 = vset.pattern.permute.xlu0 0
        %299 = vperm.xlu0 %298, %v293
        %v300 = vpop.permute.xlu0 %299
        %v302 = vsub.f32 %v232, %v296
        %v303 = vsub.f32 %v235, %v300
        %v304 = vmul.f32 %v262, %v262
        %v305 = vmul.f32 %v263, %v263
        %v306 = vmul.f32 %v282, %v282
        %v307 = vmul.f32 %v283, %v283
        %v308 = vadd.f32 %v304, %v306
        %v309 = vadd.f32 %v305, %v307
        %v310 = vmul.f32 %v302, %v302
        %v311 = vmul.f32 %v303, %v303
        %v312 = vadd.f32 %v308, %v310
        %v313 = vadd.f32 %v309, %v311
        %v314 = vrsqrt.pop %v312
        %v315 = vmul.f32 %v312, %v314
        %vm316 = vcmp.eq.f32.partialorder %v312, inf
        %v317 = vsel %vm316, %v312, %v315
        %vm318 = vcmp.eq.f32.partialorder %v312, 0.0
        %v319 = vand.u32 %v312, 2147483648
        %v320 = vsel %vm318, %v319, %v317
        %v321 = vrsqrt.pop %v313
        %v322 = vmul.f32 %v313, %v321
        %vm323 = vcmp.eq.f32.partialorder %v313, inf
        %v324 = vsel %vm323, %v313, %v322
        %vm325 = vcmp.eq.f32.partialorder %v313, 0.0
        %v326 = vand.u32 %v313, 2147483648
        %v327 = vsel %vm325, %v326, %v324
        %v328 = vlaneseq
        %v329 = vshrl.u32 %v328, 7
        %v330 = vlaneseq
        %v331 = vshrl.u32 %v330, 7
        %v332 = vsub.s32 0, %v331
        %v333 = vrot.slane %v242, %v332
        %v334 = vlaneseq
        %v335 = vshrl.u32 %v334, 7
        %v336 = vsub.s32 0, %v335
        %v337 = vrot.slane %v243, %v336
        %338 = vset.pattern.permute.xlu0 0
        %339 = vperm.xlu0 %338, %v333
        %v340 = vpop.permute.xlu0 %339
        %341 = vset.pattern.permute.xlu0 0
        %342 = vperm.xlu0 %341, %v337
        %v343 = vpop.permute.xlu0 %342
        %vm344 = vcmp.lt.s32.totalorder %v329, %v340
        %vm345 = vcmp.lt.s32.totalorder %v329, %v343
        %v346 = vsel %vm344, 1.0, 1e+15
        %v347 = vsel %vm345, 1.0, 1e+15
        %v348 = vmul.f32 %v320, %v346
        %v349 = vmul.f32 %v327, %v347
        %350 = vmin.xlane.f32.xlu0 %v348
        %v351 = vpop.xlane.xlu0 %350
        %352 = vmin.xlane.f32.xlu0 %v349
        %v353 = vpop.xlane.xlu0 %352
        %v354 = vsub.f32 %v351, %v348
        %v355 = vsub.f32 %v353, %v349
        %v356 = vmax.f32 %v354, -80.0
        %v357 = vmax.f32 %v355, -80.0
        %v358 = vmul.f32 %v356, 1.442695
        %v359 = vpow.pop %v358
        %v360 = vmul.f32 %v357, 1.442695
        %v361 = vpow.pop %v360
        %v362 = vmul.f32 %v348, %v359
        %v363 = vmul.f32 %v349, %v361
        %364 = vadd.xlane.f32.xlu0 %v362
        %v365 = vpop.xlane.xlu0 %364
        %366 = vadd.xlane.f32.xlu0 %v363
        %v367 = vpop.xlane.xlu0 %366
        %368 = vadd.xlane.f32.xlu0 %v359
        %v369 = vpop.xlane.xlu0 %368
        %370 = vadd.xlane.f32.xlu0 %v361
        %v371 = vpop.xlane.xlu0 %370
        %v372 = vrcp.pop %v369
        %v373 = vmul.f32 %v365, %v372
        %v374 = vrcp.pop %v371
        %v375 = vmul.f32 %v367, %v374
        %v376 = vrot.slane %v373, 4
        %v377 = vmin.f32 %v373, %v376
        %v378 = vrot.slane %v377, 2
        %v379 = vmin.f32 %v377, %v378
        %v380 = vrot.slane %v379, 1
        %v381 = vmin.f32 %v379, %v380
        %v382 = vrot.slane %v375, 4
        %v383 = vmin.f32 %v375, %v382
        %v384 = vrot.slane %v383, 2
        %v385 = vmin.f32 %v383, %v384
        %v386 = vrot.slane %v385, 1
        %v387 = vmin.f32 %v385, %v386
        %v388 = vsub.f32 %v381, %v373
        %v389 = vsub.f32 %v387, %v375
        %v390 = vmax.f32 %v388, -80.0
        %v391 = vmax.f32 %v389, -80.0
        %v392 = vmul.f32 %v390, 1.442695
        %v393 = vpow.pop %v392
        %v394 = vmul.f32 %v391, 1.442695
        %v395 = vpow.pop %v394
        %v396 = vmul.f32 %v373, %v393
        %v397 = vmul.f32 %v375, %v395
        %v398 = vrot.slane %v396, 4
        %v399 = vadd.f32 %v396, %v398
        %v400 = vrot.slane %v399, 2
        %v401 = vadd.f32 %v399, %v400
        %v402 = vrot.slane %v401, 1
        %v403 = vadd.f32 %v401, %v402
        %v404 = vrot.slane %v397, 4
        %v405 = vadd.f32 %v397, %v404
        %v406 = vrot.slane %v405, 2
        %v407 = vadd.f32 %v405, %v406
        %v408 = vrot.slane %v407, 1
        %v409 = vadd.f32 %v407, %v408
        %v410 = vrot.slane %v393, 4
        %v411 = vadd.f32 %v393, %v410
        %v412 = vrot.slane %v411, 2
        %v413 = vadd.f32 %v411, %v412
        %v414 = vrot.slane %v413, 1
        %v415 = vadd.f32 %v413, %v414
        %v416 = vrot.slane %v395, 4
        %v417 = vadd.f32 %v395, %v416
        %v418 = vrot.slane %v417, 2
        %v419 = vadd.f32 %v417, %v418
        %v420 = vrot.slane %v419, 1
        %v421 = vadd.f32 %v419, %v420
        %v422 = vrcp.pop %v415
        %v423 = vmul.f32 %v403, %v422
        %v424 = vrcp.pop %v421
        %v425 = vmul.f32 %v409, %v424
        %vm426 = vcmask 0
        %v427 = vsel %vm426, %v423, 0.0
        %v428 = vsel %vm426, %v425, 0.0
        %v429 = vadd.f32 %v427, %v428
        %430 = vadd.xlane.f32.xlu0 %v429
        %v431 = vpop.xlane.xlu0 %430
        %v432 = vrot.slane %v431, 4
        %v433 = vadd.f32 %v431, %v432
        %v434 = vrot.slane %v433, 2
        %v435 = vadd.f32 %v433, %v434
        %v436 = vrot.slane %v435, 1
        %v437 = vadd.f32 %v435, %v436
        %s438 = vtos %v437
        %s439 = smul.f32 %s438, 0.25
        %v440 = vstv %s439
        %441 = vst.msk [vmem:[%s229] sm:$0x1] %vm426, %v440
        %p442 = scmp.lt.s32.totalorder %s17, 1
        %s443 = scalar_select %p442, %s17, 1
        %s444 = scalar_lea.vmem %s3, %s443
        // Predicated region
        $region37: #{tpu_custom_call.1} parent=31 // pred_check
          %p445 = pneg %p113
        $region38: #{tpu_custom_call.1} parent=31 // pred_check_branch
          %447 = sbr.rel (%p445) target = $region40
        $region39: #{tpu_custom_call.1} parent=31 // pred_region
          _
        $region40: #{tpu_custom_call.1} parent=31 // pred_fallthru
          _
      $region32: #{tpu_custom_call.1} parent=5 // pred_fallthru
        _
      %p448 = scmp.le.s32.totalorder 2, %s12
      // Predicated region
      $region41: #{tpu_custom_call.1} parent=5 // pred_check
        %p449 = pneg %p448
      $region42: #{tpu_custom_call.1} parent=5 // pred_check_branch
        %451 = sbr.rel (%p449) target = $region44
      $region43: #{tpu_custom_call.1} parent=5 // pred_region
        %s452 = ssub.s32 %s12, 2
        // Predicated region
        $region45: #{tpu_custom_call.1} parent=43 // pred_check
          %p453 = pneg %p119
        $region46: #{tpu_custom_call.1} parent=43 // pred_check_branch
          %455 = sbr.rel (%p453) target = $region48
        $region47: #{tpu_custom_call.1} parent=43 // pred_region
          %p456 = scmp.lt.s32.totalorder %s18, 1
          %s457 = scalar_select %p456, %s18, 1
          %s458 = scalar_lea.vmem %s3, %s457
        $region48: #{tpu_custom_call.1} parent=43 // pred_fallthru
          _
      $region44: #{tpu_custom_call.1} parent=5 // pred_fallthru
        _
    $region6: #{tpu_custom_call.1} parent=1 // loop_footer
      %s16 = sadd.s32 1, %s12
    $region7: #{tpu_custom_call.1} parent=1 // loop_footer_branch
      %11 = sbr.rel target = $region3
    $region8: #{tpu_custom_call.1} parent=1 // loop_exit
      _
    %459 = vsyncpa [#allocation3], 1
    %s460 = scalar_lea.sflag [#allocation3], 1
    %461 = vsyncpa %s460, 1

</llo_original>
